<compile_context>
chip_gen: v5e
topology: v5e:2x2
jax: 0.10.0
libtpu: 0.0.40
codegen_flags: <defaults>
</compile_context>

<pallas_src>
import math
from functools import partial

import numpy as np
import jax
import jax.numpy as jnp
from jax.experimental import pallas as pl
from jax.experimental.pallas import tpu as pltpu


def _round_up(x, m):
    return (x + m - 1) // m * m


def _make_sinc_resample_kernel(orig_freq, new_freq, lowpass_filter_width=6, rolloff=0.99):
    """NumPy replica of torchaudio._get_sinc_resample_kernel (hann window, float32)."""
    g = math.gcd(int(orig_freq), int(new_freq))
    orig, new = int(orig_freq) // g, int(new_freq) // g
    base = min(orig, new) * rolloff
    width = int(math.ceil(lowpass_filter_width * orig / base))
    idx = np.arange(-width, width + orig, dtype=np.float64)[None, :] / orig
    t = np.arange(0, -new, -1, dtype=np.float64)[:, None] / new + idx
    t = np.clip(t * base, -lowpass_filter_width, lowpass_filter_width)
    window = np.cos(t * math.pi / lowpass_filter_width / 2.0) ** 2
    t = t * math.pi
    scale = base / orig
    safe_t = np.where(t == 0.0, 1.0, t)
    kern = np.where(t == 0.0, 1.0, np.sin(safe_t) / safe_t) * window * scale
    return kern.astype(np.float32), width, orig, new       # kern: (new, orig + 2*width)


def _resample_matmul_kernel(x_ref, w_ref, o_ref):
    # x_ref: (1, FBLK, KW) bf16   w_ref: (KW, NEW) bf16   o_ref: (1, FBLK, NEW) bf16/f32
    # One MXU matmul with f32 accumulation; the epilogue cast is the only VPU work.
    o_ref[0] = jnp.dot(x_ref[0], w_ref[...],
                       preferred_element_type=jnp.float32).astype(o_ref.dtype)


def _pick_frame_block(n_frames, batch, frame_cap):
    """Adaptive frame block: large enough to amortize the ~0.35us per-grid-step overhead,
    but fp = nfb*fblk stays close to n_frames (little garbage compute), fblk is a
    multiple of 16 (bf16 sublane packing), and there are >= 2 grid steps when batch == 1
    so both v7x TensorCores get work."""
    min_blocks = 2 if (batch == 1 and n_frames > 16) else 1
    nfb = max(min_blocks, -(-n_frames // frame_cap))           # ceil(n_frames / cap)
    fblk = _round_up(-(-n_frames // nfb), 16)                  # ceil(n_frames / nfb) -> x16
    return fblk


@partial(jax.jit, static_argnames=("width", "orig", "new", "frame_cap", "out_bf16"))
def _resample_batch(x, w, *, width, orig, new, frame_cap=2048, out_bf16=True):
    """x: (B, L) f32 padded batch, w: (orig+2*width, new) bf16 transposed sinc kernel.
    Returns (B, ceil(new*L/orig)) f32 resampled batch."""
    B, L = x.shape
    kw = orig + 2 * width
    tail = 2 * width
    n_frames = L // orig + 1                   # == torchaudio conv1d output frame count
    fblk = _pick_frame_block(n_frames, B, frame_cap)
    fp = _round_up(n_frames, fblk)
    nfb = fp // fblk

    # Build the stride-`orig` frame matrix (B, fp, kw) directly in bf16: pad -> reshape
    # -> two slices -> concat, fused by XLA (under jit) into a single materialization,
    # so there is no separate f32 padded-array HBM round trip.  Frames >= n_frames only
    # touch the zero right-padding or are discarded by the final truncation; frames
    # < n_frames match torchaudio's (width, width + orig) padding exactly.
    padded = jnp.zeros((B, (fp + 1) * orig), jnp.bfloat16)
    padded = padded.at[:, width:width + L].set(x.astype(jnp.bfloat16))
    chunks = padded.reshape(B, fp + 1, orig)
    frames = jnp.concatenate([chunks[:, :fp], chunks[:, 1:, :tail]], axis=-1)  # (B,fp,kw)

    out_dtype = jnp.bfloat16 if out_bf16 else jnp.float32
    out = pl.pallas_call(
        _resample_matmul_kernel,
        out_shape=jax.ShapeDtypeStruct((B, fp, new), out_dtype),
        grid_spec=pl.GridSpec(
            grid=(B, nfb),
            in_specs=[
                pl.BlockSpec((1, fblk, kw), lambda b, f: (b, f, 0)),
                pl.BlockSpec((kw, new), lambda b, f: (0, 0)),   # weight stays resident
            ],
            # Last dim `new` (320/160) kept exact (not padded to a 128 multiple): the
            # (frame, phase) interleave needs precisely `new` columns per frame, and
            # padding would add output bytes + a post-slice on a memory-bound kernel.
            out_specs=pl.BlockSpec((1, fblk, new), lambda b, f: (b, f, 0)),
        ),
        compiler_params=pltpu.CompilerParams(
            dimension_semantics=("parallel", "parallel")),
        cost_estimate=pl.CostEstimate(
            flops=2 * B * fp * kw * new,
            transcendentals=0,
            bytes_accessed=2 * (frames.size + w.size)
            + (2 if out_bf16 else 4) * B * fp * new),
    )(frames, w)

    # (B, fp, new) -> interleaved time axis, truncated exactly like torchaudio; the f32
    # cast fuses into this final slice copy.
    target_len = -(-(new * L) // orig)                         # ceil(new * L / orig)
    return out.reshape(B, fp * new)[:, :target_len].astype(jnp.float32)


class DataProcessorPallas:
    """Pallas/JAX equivalent of DataProcessor.forward (eval mode)."""

    def __init__(self, target_rate: int = 16000):
        self.target_rate = target_rate
        # Mirrors the module's pre-built 22.05 kHz / 44.1 kHz resamplers.
        self._resamplers = {}
        for sr in (22050, 44100):
            kern, width, orig, new = _make_sinc_resample_kernel(sr, target_rate)
            w = jnp.asarray(kern.T, dtype=jnp.bfloat16)        # (orig + 2*width, new)
            self._resamplers[sr] = (w, width, orig, new)

    def __call__(self, x, sample_rate: int = 16000):
        # TODO(synk): the list-of-waveforms handling (pad_sequence / unpad_sequence) and
        # the sample-rate dispatch are data-dependent host logic; they stay in Python and
        # only the resampling convolution runs inside the Pallas kernel.
        if sample_rate == 16000:
            return x
        lengths = [int(wv.shape[-1]) for wv in x]
        longest = max(lengths)
        percents = [n / longest for n in lengths]
        batch = jnp.stack(
            [jnp.pad(wv.astype(jnp.float32), (0, longest - n)) for wv, n in zip(x, lengths)])
        if sample_rate not in self._resamplers:
            return batch                       # module quirk: returns the padded batch
        w, width, orig, new = self._resamplers[sample_rate]
        resampled = _resample_batch(batch, w, width=width, orig=orig, new=new)
        total = int(resampled.shape[-1])
        wav_len = [int(p * total) for p in percents]
        return [resampled[i, :wav_len[i]] for i in range(len(wav_len))]


def _reference_resample(x, kern, width, orig, new):
    """Pure-JAX f32 replica of torchaudio._apply_sinc_resample_kernel (validation only)."""
    B, L = x.shape
    kw = kern.shape[1]
    padded = jnp.pad(x, ((0, 0), (width, width + orig)))
    n_frames = L // orig + 1
    frames = jnp.stack([padded[:, f * orig:f * orig + kw] for f in range(n_frames)], 1)
    y = jnp.einsum("bfk,nk->bfn", frames, kern).reshape(B, n_frames * new)
    return y[:, : -(-(new * L) // orig)]


if __name__ == "__main__":
    key = jax.random.PRNGKey(0)
    k_id, k_a, k_b = jax.random.split(key, 3)
    dp = DataProcessorPallas(target_rate=16000)

    # 16 kHz input: identity path (no kernel), same list object returned.
    wavs16 = [jax.random.normal(k_id, (1234,), jnp.float32)]
    assert dp(wavs16, sample_rate=16000) is wavs16

    # 22.05 kHz (B=2, single frame block) and 44.1 kHz (B=1 -> 2 frame blocks) paths.
    cases = ((22050, k_a, [3000, 2000]), (44100, k_b, [20000]))
    for sr, kk, lens in cases:
        wavs = [jax.random.normal(sub, (n,), jnp.float32)
                for sub, n in zip(jax.random.split(kk, len(lens)), lens)]
        out = dp(wavs, sample_rate=sr)
        out = [jax.block_until_ready(o) for o in out]

        # f32 reference using the same sinc kernel (bf16 operands/output in the Pallas
        # path -> loose tolerance).
        kern, width, orig, new = _make_sinc_resample_kernel(sr, 16000)
        longest = max(lens)
        x_pad = jnp.stack([jnp.pad(wv, (0, longest - wv.shape[0])) for wv in wavs])
        ref = _reference_resample(x_pad, jnp.asarray(kern), width, orig, new)
        total = int(ref.shape[-1])
        for i, n in enumerate(lens):
            wl = int(n / longest * total)
            assert out[i].shape == (wl,), (sr, out[i].shape, wl)
            err = float(jnp.max(jnp.abs(out[i] - ref[i, :wl])))
            assert jnp.allclose(out[i], ref[i, :wl], atol=5e-2, rtol=5e-2), (sr, err)

    print("KERNEL_OK")
</pallas_src>

<mosaic_0001>
module attributes {stable_mosaic.version = 11 : i64} {
  func.func @_resample_matmul_kernel(%arg0: i32, %arg1: i32, %arg2: memref<1x16x459xbf16, #tpu.memory_space<vmem>>, %arg3: memref<459x320xbf16, #tpu.memory_space<vmem>>, %arg4: memref<1x16x320xbf16, #tpu.memory_space<vmem>>) attributes {dimension_semantics = [#tpu.dimension_semantics<parallel>, #tpu.dimension_semantics<parallel>], iteration_bounds = array<i64: 2, 1>, scalar_prefetch = 0 : i64, scratch_operands = 0 : i64, tpu.core_type = #tpu.core_type<tc>, window_params = [{transform_indices = @transform_0, window_bounds = array<i64: 1, 16, 459>}, {pipeline_mode = #tpu.pipeline_mode<synchronous>, transform_indices = @transform_1, window_bounds = array<i64: 459, 320>}, {transform_indices = @transform_2, window_bounds = array<i64: 1, 16, 320>}]} {
    %c0 = arith.constant 0 : index
    %c0_0 = arith.constant 0 : index
    %c0_1 = arith.constant 0 : index
    %0 = vector.load %arg2[%c0, %c0_0, %c0_1] : memref<1x16x459xbf16, #tpu.memory_space<vmem>>, vector<1x16x459xbf16>
    %1 = vector.shape_cast %0 : vector<1x16x459xbf16> to vector<16x459xbf16>
    %c0_2 = arith.constant 0 : index
    %c0_3 = arith.constant 0 : index
    %2 = vector.load %arg3[%c0_2, %c0_3] : memref<459x320xbf16, #tpu.memory_space<vmem>>, vector<459x320xbf16>
    %cst = arith.constant dense<0.000000e+00> : vector<16x320xf32>
    %3 = tpu.matmul %1, %2, %cst {dimension_numbers = #tpu.dot_dimension_numbers<[1], [0], [0], [1], [0, 0, 1, 1], [], []>} : vector<16x459xbf16>, vector<459x320xbf16>, vector<16x320xf32> -> vector<16x320xf32>
    %4 = arith.truncf %3 : vector<16x320xf32> to vector<16x320xbf16>
    %c0_4 = arith.constant 0 : index
    %c0_5 = arith.constant 0 : index
    %c0_6 = arith.constant 0 : index
    %5 = vector.load %arg4[%c0_4, %c0_5, %c0_6] : memref<1x16x320xbf16, #tpu.memory_space<vmem>>, vector<1x16x320xbf16>
    %6 = vector.shape_cast %5 : vector<1x16x320xbf16> to vector<16x320xbf16>
    %7 = vector.shape_cast %4 : vector<16x320xbf16> to vector<1x16x320xbf16>
    tpu.vector_store %arg4[%c0_4, %c0_5, %c0_6], %7 {strides = array<i32>} : memref<1x16x320xbf16, #tpu.memory_space<vmem>>, vector<1x16x320xbf16>,
    return
  }
  func.func @transform_0(%arg0: i32, %arg1: i32) -> (i32, i32, i32) {
    %c0_i32 = arith.constant 0 : i32
    %c0_i32_0 = arith.constant 0 : i32
    return %arg0, %arg1, %c0_i32 : i32, i32, i32
  }
  func.func @transform_1(%arg0: i32, %arg1: i32) -> (i32, i32) {
    %c0_i32 = arith.constant 0 : i32
    %c0_i32_0 = arith.constant 0 : i32
    %c0_i32_1 = arith.constant 0 : i32
    return %c0_i32, %c0_i32_0 : i32, i32
  }
  func.func @transform_2(%arg0: i32, %arg1: i32) -> (i32, i32, i32) {
    %c0_i32 = arith.constant 0 : i32
    %c0_i32_0 = arith.constant 0 : i32
    return %arg0, %arg1, %c0_i32 : i32, i32, i32
  }
}

</mosaic_0001>

<llo_original>
// kernel: _resample_batch.1
$region0: #{_resample_batch.1}
  #allocation0 [shape = 'u32[]', space=smem, size = 0x4, offset = 0x4, fixed_abs, tag = 'smem constant byte address 0x4 - core index']
  #allocation1 [shape = 'u32[72,128]{1,0:T(1,128)}', space=vmem, size = 0x9000, scoped, tag = 'internal scratch']
  %s0 = inlined_call_operand.vmem [shape: bf16[2,16,459], index: 0, kind: input, shape index: {}]
  %s1 = inlined_call_operand.vmem [shape: bf16[459,320], index: 1, kind: input, shape index: {}]
  %s2 = inlined_call_operand.vmem [shape: bf16[2,16,320], index: 2, kind: output, shape index: {}]
  %s3 = sld [smem:[#allocation0]]
  $region41: #{_resample_batch.1} parent=0
    _
  %s5 = ssub.s32 1, %s3
  %s6 = scalar_select 0, %s5, %s3
  loop: start=0, step=1, limit=4
  $region2: #{_resample_batch.1} parent=0 // loop_pre_header
    _
  $region3: #{_resample_batch.1} parent=0 // loop_header
    %s8 = sphi 0, %s12
    %p9 = scmp.ge.s32.totalorder %s8, 4
    %s15 = sphi 0, %s27
    %s16 = sphi 0, %s23
    %s17 = sphi 0, %s15
    %s18 = sphi 0, %s16
    %s19 = sphi 0, %s17
    %s20 = sphi 0, %s18
    %s32 = sphi 0, %s34
    %s35 = sphi 0, %s32
    %s36 = sphi 0, %s35
    %s52 = sphi 0, %s36
    %s56 = sphi 0, %s56
    %s58 = sphi 0, %s56
    %s59 = sphi 0, %s58
    %s73 = sphi 0, %s59
    %s81 = sphi 0, %s83
    %s84 = sphi 0, %s81
    %s85 = sphi 0, %s84
    %s101 = sphi 0, %s85
  $region4: #{_resample_batch.1} parent=0 // loop_header_branch
    %11 = sbr.rel (%p9) target = $region8
  $region5: #{_resample_batch.1} parent=0 // loop_body
    %s13 = ssub.s32 %s8, 1
    %s14 = ssub.s32 %s8, 2
    %s21 = sadd.s32 1, %s16
    %p22 = scmp.ge.s32.totalorder %s21, 1
    %s23 = scalar_select %p22, 0, %s21
    %s24 = sadd.s32 1, %s15
    %s25 = scalar_select %p22, %s24, %s15
    %p26 = scmp.ge.s32.totalorder %s25, 2
    %s27 = scalar_select %p26, 0, %s25
    %s28 = ssub.s32 %s15, %s27
    %s29 = ssub.s32 %s16, %s23
    %s30 = sor.u32 %s28, %s29
    %p31 = scmp.eq.s32.totalorder %s30, 0
    %s33 = sadd.s32 %s32, 1
    %s34 = scalar_select %p31, %s32, %s33
    %p37 = pneg %p31
    %p38 = scmp.eq.s32.totalorder %s8, 1
    %p39 = por %p37, %p38
    %p40 = scmp.ne.s32.totalorder %s32, %s35
    %p41 = scmp.eq.s32.totalorder %s8, 0
    %p42 = por %p40, %p41
    %p43 = scmp.ne.s32.totalorder %s32, %s35
    %p44 = scmp.eq.s32.totalorder %s13, 1
    %p45 = por %p43, %p44
    %p46 = scmp.ne.s32.totalorder %s35, %s36
    %p47 = scmp.eq.s32.totalorder %s13, 0
    %p48 = por %p46, %p47
    %p49 = scmp.ne.s32.totalorder %s35, %s36
    %p50 = scmp.eq.s32.totalorder %s14, 1
    %p51 = por %p49, %p50
    %p53 = scmp.ne.s32.totalorder %s36, %s52
    %p54 = scmp.eq.s32.totalorder %s14, 0
    %p55 = por %p53, %p54
    %s57 = sadd.s32 %s56, 1
    %p60 = scmp.eq.s32.totalorder %s8, 1
    %p61 = scmp.ne.s32.totalorder %s56, %s58
    %p62 = scmp.eq.s32.totalorder %s8, 0
    %p63 = por %p61, %p62
    %p64 = scmp.ne.s32.totalorder %s56, %s58
    %p65 = scmp.eq.s32.totalorder %s13, 1
    %p66 = por %p64, %p65
    %p67 = scmp.ne.s32.totalorder %s58, %s59
    %p68 = scmp.eq.s32.totalorder %s13, 0
    %p69 = por %p67, %p68
    %p70 = scmp.ne.s32.totalorder %s58, %s59
    %p71 = scmp.eq.s32.totalorder %s14, 1
    %p72 = por %p70, %p71
    %p74 = scmp.ne.s32.totalorder %s59, %s73
    %p75 = scmp.eq.s32.totalorder %s14, 0
    %p76 = por %p74, %p75
    %s77 = ssub.s32 %s15, %s27
    %s78 = ssub.s32 %s16, %s23
    %s79 = sor.u32 %s77, %s78
    %p80 = scmp.eq.s32.totalorder %s79, 0
    %s82 = sadd.s32 %s81, 1
    %s83 = scalar_select %p80, %s81, %s82
    %p86 = pneg %p80
    %p87 = scmp.eq.s32.totalorder %s8, 1
    %p88 = por %p86, %p87
    %p89 = scmp.ne.s32.totalorder %s81, %s84
    %p90 = scmp.eq.s32.totalorder %s8, 0
    %p91 = por %p89, %p90
    %p92 = scmp.ne.s32.totalorder %s81, %s84
    %p93 = scmp.eq.s32.totalorder %s13, 1
    %p94 = por %p92, %p93
    %p95 = scmp.ne.s32.totalorder %s84, %s85
    %p96 = scmp.eq.s32.totalorder %s13, 0
    %p97 = por %p95, %p96
    %p98 = scmp.ne.s32.totalorder %s84, %s85
    %p99 = scmp.eq.s32.totalorder %s14, 1
    %p100 = por %p98, %p99
    %p102 = scmp.ne.s32.totalorder %s85, %s101
    %p103 = scmp.eq.s32.totalorder %s14, 0
    %p104 = por %p102, %p103
    %p105 = scmp.le.s32.totalorder 1, %s8
    %p106 = scmp.lt.s32.totalorder %s8, 3
    %p107 = pnand %p105, %p106
    %p108 = pneg %p107
    // Predicated region
    $region9: #{_resample_batch.1} parent=5 // pred_check
      _
    $region10: #{_resample_batch.1} parent=5 // pred_check_branch
      %110 = sbr.rel (%p107) target = $region12
    $region11: #{_resample_batch.1} parent=5 // pred_region
      %s111 = ssub.s32 %s8, 1
      // Predicated region
      $region13: #{_resample_batch.1} parent=11 // pred_check
        %p112 = pneg %p69
      $region14: #{_resample_batch.1} parent=11 // pred_check_branch
        %114 = sbr.rel (%p112) target = $region16
      $region15: #{_resample_batch.1} parent=11 // pred_region
        _
      $region16: #{_resample_batch.1} parent=11 // pred_fallthru
        _
    $region12: #{_resample_batch.1} parent=5 // pred_fallthru
      _
    %p115 = scmp.lt.s32.totalorder %s8, 2
    // Predicated region
    $region17: #{_resample_batch.1} parent=5 // pred_check
      %p116 = pneg %p115
    $region18: #{_resample_batch.1} parent=5 // pred_check_branch
      %118 = sbr.rel (%p116) target = $region20
    $region19: #{_resample_batch.1} parent=5 // pred_region
      // Predicated region
      $region21: #{_resample_batch.1} parent=19 // pred_check
        %p119 = pneg %p42
      $region22: #{_resample_batch.1} parent=19 // pred_check_branch
        %121 = sbr.rel (%p119) target = $region24
      $region23: #{_resample_batch.1} parent=19 // pred_region
        %s122 = smul.u32 2, %s16
        %p123 = scmp.lt.s32.totalorder %s15, 1
        %s124 = scalar_select %p123, %s15, 1
        %p125 = scmp.lt.s32.totalorder %s122, 1
        %s126 = scalar_select %p125, %s122, 1
        %s127 = smul.addr %s126, 4
        %s128 = smul.addr %s124, 8
        %s129 = sadd.s32 %s127, %s128
        %s130 = smul.addr %s129, 4
        %s131 = scalar_lea.vmem %s0, %s130
        %s132 = smul.u32 2, %s16
      $region24: #{_resample_batch.1} parent=19 // pred_fallthru
        _
    $region20: #{_resample_batch.1} parent=5 // pred_fallthru
      _
    %p133 = scmp.le.s32.totalorder 1, %s8
    %p134 = scmp.lt.s32.totalorder %s8, 3
    %p135 = pnand %p133, %p134
    %p136 = pneg %p135
    // Predicated region
    $region25: #{_resample_batch.1} parent=5 // pred_check
      _
    $region26: #{_resample_batch.1} parent=5 // pred_check_branch
      %138 = sbr.rel (%p135) target = $region28
    $region27: #{_resample_batch.1} parent=5 // pred_region
      %s139 = ssub.s32 %s8, 1
      %s140 = smul.u32 2, %s18
      %p141 = scmp.lt.s32.totalorder %s17, 1
      %s142 = scalar_select %p141, %s17, 1
      %p143 = scmp.lt.s32.totalorder %s140, 1
      %s144 = scalar_select %p143, %s140, 1
      %s145 = smul.addr %s144, 4
      %s146 = smul.addr %s142, 8
      %s147 = sadd.s32 %s145, %s146
      %s148 = smul.addr %s147, 4
      %s149 = scalar_lea.vmem %s0, %s148
      %p150 = pneg %p48
      %p151 = pneg %p45
      %p152 = pneg %p69
      %p153 = pneg %p66
      %p154 = pneg %p97
      %p155 = pneg %p94
      %s156 = smul.u32 2, %s18
      %p157 = scmp.lt.s32.totalorder %s17, 1
      %s158 = scalar_select %p157, %s17, 1
      %p159 = scmp.lt.s32.totalorder %s156, 1
      %s160 = scalar_select %p159, %s156, 1
      %s161 = smul.addr %s160, 3
      %s162 = smul.addr %s158, 6
      %s163 = sadd.s32 %s161, %s162
      %s164 = smul.addr %s163, 4
      %s165 = scalar_lea.vmem %s2, %s164
      %s166 = smul.u32 2, %s18
      %p167 = scmp.lt.s32.totalorder %s17, 1
      %s168 = scalar_select %p167, %s17, 1
      %p169 = scmp.lt.s32.totalorder %s166, 1
      %s170 = scalar_select %p169, %s166, 1
      %s171 = smul.addr %s170, 4
      %s172 = smul.addr %s168, 8
      %s173 = sadd.s32 %s171, %s172
      %s174 = smul.addr %s173, 4
      %s175 = scalar_lea.vmem %s0, %s174
      %s176 = smul.u32 2, %s18
      %s177 = smul.u32 2, %s18
      %p178 = scmp.lt.s32.totalorder %s17, 1
      %s179 = scalar_select %p178, %s17, 1
      %p180 = scmp.lt.s32.totalorder %s177, 1
      %s181 = scalar_select %p180, %s177, 1
      %s182 = smul.addr %s181, 3
      %s183 = smul.addr %s179, 6
      %s184 = sadd.s32 %s182, %s183
      %s185 = smul.addr %s184, 4
      %s186 = scalar_lea.vmem %s2, %s185
      %s187 = smul.u32 2, %s18
      %v189 = vld [vmem:[%s175] sm:$0xff]
      %v190 = vld [vmem:[%s175 + $0x8] sm:$0xff]
      %v191 = vld [vmem:[%s175 + $0x10] sm:$0xff]
      %v192 = vld [vmem:[%s175 + $0x18] sm:$0xff]
      %v193 = vld [vmem:[%s1] sm:$0xff]
      %v194 = vld [vmem:[%s1 + $0x8] sm:$0xf]
      %v195 = vld [vmem:[%s1 + $0xc] sm:$0xff]
      %v196 = vld [vmem:[%s1 + $0x14] sm:$0xf]
      %v197 = vld [vmem:[%s1 + $0x18] sm:$0xff]
      %v198 = vld [vmem:[%s1 + $0x20] sm:$0xf]
      %v199 = vld [vmem:[%s1 + $0x24] sm:$0xff]
      %v200 = vld [vmem:[%s1 + $0x2c] sm:$0xf]
      %v201 = vld [vmem:[%s1 + $0x30] sm:$0xff]
      %v202 = vld [vmem:[%s1 + $0x38] sm:$0xf]
      %v203 = vld [vmem:[%s1 + $0x3c] sm:$0xff]
      %v204 = vld [vmem:[%s1 + $0x44] sm:$0xf]
      %v205 = vld [vmem:[%s1 + $0x48] sm:$0xff]
      %v206 = vld [vmem:[%s1 + $0x50] sm:$0xf]
      %v207 = vld [vmem:[%s1 + $0x54] sm:$0xff]
      %v208 = vld [vmem:[%s1 + $0x5c] sm:$0xf]
      %v209 = vld [vmem:[%s1 + $0x60] sm:$0xff]
      %v210 = vld [vmem:[%s1 + $0x68] sm:$0xf]
      %v211 = vld [vmem:[%s1 + $0x6c] sm:$0xff]
      %v212 = vld [vmem:[%s1 + $0x74] sm:$0xf]
      %v213 = vld [vmem:[%s1 + $0x78] sm:$0xff]
      %v214 = vld [vmem:[%s1 + $0x80] sm:$0xf]
      %v215 = vld [vmem:[%s1 + $0x84] sm:$0xff]
      %v216 = vld [vmem:[%s1 + $0x8c] sm:$0xf]
      %v217 = vld [vmem:[%s1 + $0x90] sm:$0xff]
      %v218 = vld [vmem:[%s1 + $0x98] sm:$0xf]
      %v219 = vld [vmem:[%s1 + $0x9c] sm:$0xff]
      %v220 = vld [vmem:[%s1 + $0xa4] sm:$0xf]
      %v221 = vld [vmem:[%s1 + $0xa8] sm:$0xff]
      %v222 = vld [vmem:[%s1 + $0xb0] sm:$0xf]
      %v223 = vld [vmem:[%s1 + $0xb4] sm:$0xff]
      %v224 = vld [vmem:[%s1 + $0xbc] sm:$0xf]
      %v225 = vld [vmem:[%s1 + $0xc0] sm:$0xff]
      %v226 = vld [vmem:[%s1 + $0xc8] sm:$0xf]
      %v227 = vld [vmem:[%s1 + $0xcc] sm:$0xff]
      %v228 = vld [vmem:[%s1 + $0xd4] sm:$0xf]
      %v229 = vld [vmem:[%s1 + $0xd8] sm:$0xff]
      %v230 = vld [vmem:[%s1 + $0xe0] sm:$0xf]
      %v231 = vld [vmem:[%s1 + $0xe4] sm:$0xff]
      %v232 = vld [vmem:[%s1 + $0xec] sm:$0xf]
      %v233 = vld [vmem:[%s1 + $0xf0] sm:$0xff]
      %v234 = vld [vmem:[%s1 + $0xf8] sm:$0xf]
      %v235 = vld [vmem:[%s1 + $0xfc] sm:$0xff]
      %v236 = vld [vmem:[%s1 + $0x104] sm:$0xf]
      %v237 = vld [vmem:[%s1 + $0x108] sm:$0xff]
      %v238 = vld [vmem:[%s1 + $0x110] sm:$0xf]
      %v239 = vld [vmem:[%s1 + $0x114] sm:$0xff]
      %v240 = vld [vmem:[%s1 + $0x11c] sm:$0xf]
      %v241 = vld [vmem:[%s1 + $0x120] sm:$0xff]
      %v242 = vld [vmem:[%s1 + $0x128] sm:$0xf]
      %v243 = vld [vmem:[%s1 + $0x12c] sm:$0xff]
      %v244 = vld [vmem:[%s1 + $0x134] sm:$0xf]
      %v245 = vld [vmem:[%s1 + $0x138] sm:$0xff]
      %v246 = vld [vmem:[%s1 + $0x140] sm:$0xf]
      %v247 = vld [vmem:[%s1 + $0x144] sm:$0xff]
      %v248 = vld [vmem:[%s1 + $0x14c] sm:$0xf]
      %v249 = vld [vmem:[%s1 + $0x150] sm:$0xff]
      %v250 = vld [vmem:[%s1 + $0x158] sm:$0xf]
      %v251 = vld [vmem:[%s1 + $0x15c] sm:$0xff]
      %v252 = vld [vmem:[%s1 + $0x164] sm:$0xf]
      %v253 = vld [vmem:[%s1 + $0x168] sm:$0xff]
      %v254 = vld [vmem:[%s1 + $0x170] sm:$0xf]
      %v255 = vld [vmem:[%s1 + $0x174] sm:$0xff]
      %v256 = vld [vmem:[%s1 + $0x17c] sm:$0xf]
      %v257 = vld [vmem:[%s1 + $0x180] sm:$0xff]
      %v258 = vld [vmem:[%s1 + $0x188] sm:$0xf]
      %v259 = vld [vmem:[%s1 + $0x18c] sm:$0xff]
      %v260 = vld [vmem:[%s1 + $0x194] sm:$0xf]
      %v261 = vld [vmem:[%s1 + $0x198] sm:$0xff]
      %v262 = vld [vmem:[%s1 + $0x1a0] sm:$0xf]
      %v263 = vld [vmem:[%s1 + $0x1a4] sm:$0xff]
      %v264 = vld [vmem:[%s1 + $0x1ac] sm:$0xf]
      %v265 = vld [vmem:[%s1 + $0x1b0] sm:$0xff]
      %v266 = vld [vmem:[%s1 + $0x1b8] sm:$0xf]
      %v267 = vld [vmem:[%s1 + $0x1bc] sm:$0xff]
      %v268 = vld [vmem:[%s1 + $0x1c4] sm:$0xf]
      %v269 = vld [vmem:[%s1 + $0x1c8] sm:$0xff]
      %v270 = vld [vmem:[%s1 + $0x1d0] sm:$0xf]
      %v271 = vld [vmem:[%s1 + $0x1d4] sm:$0xff]
      %v272 = vld [vmem:[%s1 + $0x1dc] sm:$0xf]
      %v273 = vld [vmem:[%s1 + $0x1e0] sm:$0xff]
      %v274 = vld [vmem:[%s1 + $0x1e8] sm:$0xf]
      %v275 = vld [vmem:[%s1 + $0x1ec] sm:$0xff]
      %v276 = vld [vmem:[%s1 + $0x1f4] sm:$0xf]
      %v277 = vld [vmem:[%s1 + $0x1f8] sm:$0xff]
      %v278 = vld [vmem:[%s1 + $0x200] sm:$0xf]
      %v279 = vld [vmem:[%s1 + $0x204] sm:$0xff]
      %v280 = vld [vmem:[%s1 + $0x20c] sm:$0xf]
      %v281 = vld [vmem:[%s1 + $0x210] sm:$0xff]
      %v282 = vld [vmem:[%s1 + $0x218] sm:$0xf]
      %v283 = vld [vmem:[%s1 + $0x21c] sm:$0xff]
      %v284 = vld [vmem:[%s1 + $0x224] sm:$0xf]
      %v285 = vld [vmem:[%s1 + $0x228] sm:$0xff]
      %v286 = vld [vmem:[%s1 + $0x230] sm:$0xf]
      %v287 = vld [vmem:[%s1 + $0x234] sm:$0xff]
      %v288 = vld [vmem:[%s1 + $0x23c] sm:$0xf]
      %v289 = vld [vmem:[%s1 + $0x240] sm:$0xff]
      %v290 = vld [vmem:[%s1 + $0x248] sm:$0xf]
      %v291 = vld [vmem:[%s1 + $0x24c] sm:$0xff]
      %v292 = vld [vmem:[%s1 + $0x254] sm:$0xf]
      %v293 = vld [vmem:[%s1 + $0x258] sm:$0xff]
      %v294 = vld [vmem:[%s1 + $0x260] sm:$0xf]
      %v295 = vld [vmem:[%s1 + $0x264] sm:$0xff]
      %v296 = vld [vmem:[%s1 + $0x26c] sm:$0xf]
      %v297 = vld [vmem:[%s1 + $0x270] sm:$0xff]
      %v298 = vld [vmem:[%s1 + $0x278] sm:$0xf]
      %v299 = vld [vmem:[%s1 + $0x27c] sm:$0xff]
      %v300 = vld [vmem:[%s1 + $0x284] sm:$0xf]
      %v301 = vld [vmem:[%s1 + $0x288] sm:$0xff]
      %v302 = vld [vmem:[%s1 + $0x290] sm:$0xf]
      %v303 = vld [vmem:[%s1 + $0x294] sm:$0xff]
      %v304 = vld [vmem:[%s1 + $0x29c] sm:$0xf]
      %v305 = vld [vmem:[%s1 + $0x2a0] sm:$0xff]
      %v306 = vld [vmem:[%s1 + $0x2a8] sm:$0xf]
      %v307 = vld [vmem:[%s1 + $0x2ac] sm:$0x33]
      %v308 = vld [vmem:[%s1 + $0x2b4] sm:$0x3]
      %v313 = vunpack.c.l.b16 %v189
      %v314 = vunpack.c.h.b16 %v189
      %v315 = vunpack.c.l.b16 %v190
      %v316 = vunpack.c.h.b16 %v190
      %v317 = vunpack.c.l.b16 %v191
      %v318 = vunpack.c.h.b16 %v191
      %v319 = vunpack.c.l.b16 %v192
      %v320 = vunpack.c.h.b16 %v192
      %v321 = vpack.c.b16 %v317, %v313
      %v322 = vpack.c.b16 %v318, %v314
      %v323 = vpack.c.b16 %v319, %v315
      %v324 = vpack.c.b16 %v320, %v316
      %v444 = vunpack.c.l.b16 %v193
      %v445 = vunpack.c.h.b16 %v193
      %v446 = vunpack.c.l.b16 %v194
      %v447 = vunpack.c.l.b16 %v195
      %v448 = vunpack.c.h.b16 %v195
      %v449 = vunpack.c.l.b16 %v196
      %v450 = vunpack.c.l.b16 %v197
      %v451 = vunpack.c.h.b16 %v197
      %v452 = vunpack.c.l.b16 %v198
      %v453 = vunpack.c.l.b16 %v199
      %v454 = vunpack.c.h.b16 %v199
      %v455 = vunpack.c.l.b16 %v200
      %v456 = vunpack.c.l.b16 %v201
      %v457 = vunpack.c.h.b16 %v201
      %v458 = vunpack.c.l.b16 %v202
      %v459 = vunpack.c.l.b16 %v203
      %v460 = vunpack.c.h.b16 %v203
      %v461 = vunpack.c.l.b16 %v204
      %v462 = vunpack.c.l.b16 %v205
      %v463 = vunpack.c.h.b16 %v205
      %v464 = vunpack.c.l.b16 %v206
      %v465 = vunpack.c.l.b16 %v207
      %v466 = vunpack.c.h.b16 %v207
      %v467 = vunpack.c.l.b16 %v208
      %v468 = vunpack.c.l.b16 %v209
      %v469 = vunpack.c.h.b16 %v209
      %v470 = vunpack.c.l.b16 %v210
      %v471 = vunpack.c.l.b16 %v211
      %v472 = vunpack.c.h.b16 %v211
      %v473 = vunpack.c.l.b16 %v212
      %v474 = vunpack.c.l.b16 %v213
      %v475 = vunpack.c.h.b16 %v213
      %v476 = vunpack.c.l.b16 %v214
      %v477 = vunpack.c.l.b16 %v215
      %v478 = vunpack.c.h.b16 %v215
      %v479 = vunpack.c.l.b16 %v216
      %v480 = vunpack.c.l.b16 %v217
      %v481 = vunpack.c.h.b16 %v217
      %v482 = vunpack.c.l.b16 %v218
      %v483 = vunpack.c.l.b16 %v219
      %v484 = vunpack.c.h.b16 %v219
      %v485 = vunpack.c.l.b16 %v220
      %v486 = vunpack.c.l.b16 %v221
      %v487 = vunpack.c.h.b16 %v221
      %v488 = vunpack.c.l.b16 %v222
      %v489 = vunpack.c.l.b16 %v223
      %v490 = vunpack.c.h.b16 %v223
      %v491 = vunpack.c.l.b16 %v224
      %v492 = vunpack.c.l.b16 %v225
      %v493 = vunpack.c.h.b16 %v225
      %v494 = vunpack.c.l.b16 %v226
      %v495 = vunpack.c.l.b16 %v227
      %v496 = vunpack.c.h.b16 %v227
      %v497 = vunpack.c.l.b16 %v228
      %v498 = vunpack.c.l.b16 %v229
      %v499 = vunpack.c.h.b16 %v229
      %v500 = vunpack.c.l.b16 %v230
      %v501 = vunpack.c.l.b16 %v231
      %v502 = vunpack.c.h.b16 %v231
      %v503 = vunpack.c.l.b16 %v232
      %v504 = vunpack.c.l.b16 %v233
      %v505 = vunpack.c.h.b16 %v233
      %v506 = vunpack.c.l.b16 %v234
      %v507 = vunpack.c.l.b16 %v235
      %v508 = vunpack.c.h.b16 %v235
      %v509 = vunpack.c.l.b16 %v236
      %v510 = vunpack.c.l.b16 %v237
      %v511 = vunpack.c.h.b16 %v237
      %v512 = vunpack.c.l.b16 %v238
      %v513 = vunpack.c.l.b16 %v239
      %v514 = vunpack.c.h.b16 %v239
      %v515 = vunpack.c.l.b16 %v240
      %v516 = vunpack.c.l.b16 %v241
      %v517 = vunpack.c.h.b16 %v241
      %v518 = vunpack.c.l.b16 %v242
      %v519 = vunpack.c.l.b16 %v243
      %v520 = vunpack.c.h.b16 %v243
      %v521 = vunpack.c.l.b16 %v244
      %v522 = vunpack.c.l.b16 %v245
      %v523 = vunpack.c.h.b16 %v245
      %v524 = vunpack.c.l.b16 %v246
      %v525 = vunpack.c.l.b16 %v247
      %v526 = vunpack.c.h.b16 %v247
      %v527 = vunpack.c.l.b16 %v248
      %v528 = vunpack.c.l.b16 %v249
      %v529 = vunpack.c.h.b16 %v249
      %v530 = vunpack.c.l.b16 %v250
      %v531 = vunpack.c.l.b16 %v251
      %v532 = vunpack.c.h.b16 %v251
      %v533 = vunpack.c.l.b16 %v252
      %v534 = vunpack.c.l.b16 %v253
      %v535 = vunpack.c.h.b16 %v253
      %v536 = vunpack.c.l.b16 %v254
      %v537 = vunpack.c.l.b16 %v255
      %v538 = vunpack.c.h.b16 %v255
      %v539 = vunpack.c.l.b16 %v256
      %v540 = vunpack.c.l.b16 %v257
      %v541 = vunpack.c.h.b16 %v257
      %v542 = vunpack.c.l.b16 %v258
      %v543 = vunpack.c.l.b16 %v259
      %v544 = vunpack.c.h.b16 %v259
      %v545 = vunpack.c.l.b16 %v260
      %v546 = vunpack.c.l.b16 %v261
      %v547 = vunpack.c.h.b16 %v261
      %v548 = vunpack.c.l.b16 %v262
      %v549 = vunpack.c.l.b16 %v263
      %v550 = vunpack.c.h.b16 %v263
      %v551 = vunpack.c.l.b16 %v264
      %v552 = vunpack.c.l.b16 %v265
      %v553 = vunpack.c.h.b16 %v265
      %v554 = vunpack.c.l.b16 %v266
      %v555 = vunpack.c.l.b16 %v267
      %v556 = vunpack.c.h.b16 %v267
      %v557 = vunpack.c.l.b16 %v268
      %v558 = vunpack.c.l.b16 %v269
      %v559 = vunpack.c.h.b16 %v269
      %v560 = vunpack.c.l.b16 %v270
      %v561 = vunpack.c.l.b16 %v271
      %v562 = vunpack.c.h.b16 %v271
      %v563 = vunpack.c.l.b16 %v272
      %v564 = vunpack.c.l.b16 %v273
      %v565 = vunpack.c.h.b16 %v273
      %v566 = vunpack.c.l.b16 %v274
      %v567 = vunpack.c.l.b16 %v275
      %v568 = vunpack.c.h.b16 %v275
      %v569 = vunpack.c.l.b16 %v276
      %v570 = vunpack.c.l.b16 %v277
      %v571 = vunpack.c.h.b16 %v277
      %v572 = vunpack.c.l.b16 %v278
      %v573 = vunpack.c.l.b16 %v279
      %v574 = vunpack.c.h.b16 %v279
      %v575 = vunpack.c.l.b16 %v280
      %v576 = vunpack.c.l.b16 %v281
      %v577 = vunpack.c.h.b16 %v281
      %v578 = vunpack.c.l.b16 %v282
      %v579 = vunpack.c.l.b16 %v283
      %v580 = vunpack.c.h.b16 %v283
      %v581 = vunpack.c.l.b16 %v284
      %v582 = vunpack.c.l.b16 %v285
      %v583 = vunpack.c.h.b16 %v285
      %v584 = vunpack.c.l.b16 %v286
      %v585 = vunpack.c.l.b16 %v287
      %v586 = vunpack.c.h.b16 %v287
      %v587 = vunpack.c.l.b16 %v288
      %v588 = vunpack.c.l.b16 %v289
      %v589 = vunpack.c.h.b16 %v289
      %v590 = vunpack.c.l.b16 %v290
      %v591 = vunpack.c.l.b16 %v291
      %v592 = vunpack.c.h.b16 %v291
      %v593 = vunpack.c.l.b16 %v292
      %v594 = vunpack.c.l.b16 %v293
      %v595 = vunpack.c.h.b16 %v293
      %v596 = vunpack.c.l.b16 %v294
      %v597 = vunpack.c.l.b16 %v295
      %v598 = vunpack.c.h.b16 %v295
      %v599 = vunpack.c.l.b16 %v296
      %v600 = vunpack.c.l.b16 %v297
      %v601 = vunpack.c.h.b16 %v297
      %v602 = vunpack.c.l.b16 %v298
      %v603 = vunpack.c.l.b16 %v299
      %v604 = vunpack.c.h.b16 %v299
      %v605 = vunpack.c.l.b16 %v300
      %v606 = vunpack.c.l.b16 %v301
      %v607 = vunpack.c.h.b16 %v301
      %v608 = vunpack.c.l.b16 %v302
      %v609 = vunpack.c.l.b16 %v303
      %v610 = vunpack.c.h.b16 %v303
      %v611 = vunpack.c.l.b16 %v304
      %v612 = vunpack.c.l.b16 %v305
      %v613 = vunpack.c.h.b16 %v305
      %v614 = vunpack.c.l.b16 %v306
      %v615 = vunpack.c.l.b16 %v307
      %v616 = vunpack.c.h.b16 %v307
      %v617 = vunpack.c.l.b16 %v308
      %v618 = vpack.c.b16 %v447, %v444
      %v619 = vpack.c.b16 %v448, %v445
      %v620 = vpack.c.b16 %v449, %v446
      %v621 = vpack.c.b16 %v453, %v450
      %v622 = vpack.c.b16 %v454, %v451
      %v623 = vpack.c.b16 %v455, %v452
      %v624 = vpack.c.b16 %v459, %v456
      %v625 = vpack.c.b16 %v460, %v457
      %v626 = vpack.c.b16 %v461, %v458
      %v627 = vpack.c.b16 %v465, %v462
      %v628 = vpack.c.b16 %v466, %v463
      %v629 = vpack.c.b16 %v467, %v464
      %v630 = vpack.c.b16 %v471, %v468
      %v631 = vpack.c.b16 %v472, %v469
      %v632 = vpack.c.b16 %v473, %v470
      %v633 = vpack.c.b16 %v477, %v474
      %v634 = vpack.c.b16 %v478, %v475
      %v635 = vpack.c.b16 %v479, %v476
      %v636 = vpack.c.b16 %v483, %v480
      %v637 = vpack.c.b16 %v484, %v481
      %v638 = vpack.c.b16 %v485, %v482
      %v639 = vpack.c.b16 %v489, %v486
      %v640 = vpack.c.b16 %v490, %v487
      %v641 = vpack.c.b16 %v491, %v488
      %v642 = vpack.c.b16 %v495, %v492
      %v643 = vpack.c.b16 %v496, %v493
      %v644 = vpack.c.b16 %v497, %v494
      %v645 = vpack.c.b16 %v501, %v498
      %v646 = vpack.c.b16 %v502, %v499
      %v647 = vpack.c.b16 %v503, %v500
      %v648 = vpack.c.b16 %v507, %v504
      %v649 = vpack.c.b16 %v508, %v505
      %v650 = vpack.c.b16 %v509, %v506
      %v651 = vpack.c.b16 %v513, %v510
      %v652 = vpack.c.b16 %v514, %v511
      %v653 = vpack.c.b16 %v515, %v512
      %v654 = vpack.c.b16 %v519, %v516
      %v655 = vpack.c.b16 %v520, %v517
      %v656 = vpack.c.b16 %v521, %v518
      %v657 = vpack.c.b16 %v525, %v522
      %v658 = vpack.c.b16 %v526, %v523
      %v659 = vpack.c.b16 %v527, %v524
      %v660 = vpack.c.b16 %v531, %v528
      %v661 = vpack.c.b16 %v532, %v529
      %v662 = vpack.c.b16 %v533, %v530
      %v663 = vpack.c.b16 %v537, %v534
      %v664 = vpack.c.b16 %v538, %v535
      %v665 = vpack.c.b16 %v539, %v536
      %v666 = vpack.c.b16 %v543, %v540
      %v667 = vpack.c.b16 %v544, %v541
      %v668 = vpack.c.b16 %v545, %v542
      %v669 = vpack.c.b16 %v549, %v546
      %v670 = vpack.c.b16 %v550, %v547
      %v671 = vpack.c.b16 %v551, %v548
      %v672 = vpack.c.b16 %v555, %v552
      %v673 = vpack.c.b16 %v556, %v553
      %v674 = vpack.c.b16 %v557, %v554
      %v675 = vpack.c.b16 %v561, %v558
      %v676 = vpack.c.b16 %v562, %v559
      %v677 = vpack.c.b16 %v563, %v560
      %v678 = vpack.c.b16 %v567, %v564
      %v679 = vpack.c.b16 %v568, %v565
      %v680 = vpack.c.b16 %v569, %v566
      %v681 = vpack.c.b16 %v573, %v570
      %v682 = vpack.c.b16 %v574, %v571
      %v683 = vpack.c.b16 %v575, %v572
      %v684 = vpack.c.b16 %v579, %v576
      %v685 = vpack.c.b16 %v580, %v577
      %v686 = vpack.c.b16 %v581, %v578
      %v687 = vpack.c.b16 %v585, %v582
      %v688 = vpack.c.b16 %v586, %v583
      %v689 = vpack.c.b16 %v587, %v584
      %v690 = vpack.c.b16 %v591, %v588
      %v691 = vpack.c.b16 %v592, %v589
      %v692 = vpack.c.b16 %v593, %v590
      %v693 = vpack.c.b16 %v597, %v594
      %v694 = vpack.c.b16 %v598, %v595
      %v695 = vpack.c.b16 %v599, %v596
      %v696 = vpack.c.b16 %v603, %v600
      %v697 = vpack.c.b16 %v604, %v601
      %v698 = vpack.c.b16 %v605, %v602
      %v699 = vpack.c.b16 %v609, %v606
      %v700 = vpack.c.b16 %v610, %v607
      %v701 = vpack.c.b16 %v611, %v608
      %v702 = vpack.c.b16 %v615, %v612
      %v703 = vpack.c.b16 %v616, %v613
      %v704 = vpack.c.b16 %v617, %v614
      %vm789 = vcmask 613376
      %v791 = vsel %vm789, %v324, 0
      %vm793 = vcmask 1044480
      %vm794 = vcmask 1045504
      %v795 = vsel %vm793, 4294967295, 65535
      %v796 = vsel %vm794, %v795, 0
      %v798 = vand.u32 %v702, %v796
      %v801 = vand.u32 %v703, %v796
      %v804 = vand.u32 %v704, %v796
      %806 = vmatpush.bf16.msra.mxu0 %v639
      %807 = vmatpush.bf16.msra.mxu0 %v636
      %808 = vmatpush.bf16.msra.mxu0 %v633
      %809 = vmatpush.bf16.msra.mxu0 %v630
      %810 = vmatpush.bf16.msra.mxu0 %v627
      %811 = vmatpush.bf16.msra.mxu0 %v624
      %812 = vmatpush.bf16.msra.mxu0 %v621
      %813 = vmatpush.bf16.msra.mxu0 %v618
      %814 = vmatmul.bf16.gmra.mxu0 %v321
      %v815 = vpop.f32.mrf.mxu0
      %v816 = vadd.f32 0.0, %v815
      %v817 = vpop.f32.mrf.mxu0
      %v818 = vadd.f32 0.0, %v817
      %819 = vdwg.mxu0
      %820 = vmatpush.bf16.msra.mxu0 %v663
      %821 = vmatpush.bf16.msra.mxu0 %v660
      %822 = vmatpush.bf16.msra.mxu0 %v657
      %823 = vmatpush.bf16.msra.mxu0 %v654
      %824 = vmatpush.bf16.msra.mxu0 %v651
      %825 = vmatpush.bf16.msra.mxu0 %v648
      %826 = vmatpush.bf16.msra.mxu0 %v645
      %827 = vmatpush.bf16.msra.mxu0 %v642
      %828 = vmatmul.bf16.gmra.mxu0 %v322
      %v829 = vpop.f32.mrf.mxu0
      %v830 = vadd.f32 %v816, %v829
      %v831 = vpop.f32.mrf.mxu0
      %v832 = vadd.f32 %v818, %v831
      %833 = vdwg.mxu0
      %834 = vmatpush.bf16.msra.mxu0 %v687
      %835 = vmatpush.bf16.msra.mxu0 %v684
      %836 = vmatpush.bf16.msra.mxu0 %v681
      %837 = vmatpush.bf16.msra.mxu0 %v678
      %838 = vmatpush.bf16.msra.mxu0 %v675
      %839 = vmatpush.bf16.msra.mxu0 %v672
      %840 = vmatpush.bf16.msra.mxu0 %v669
      %841 = vmatpush.bf16.msra.mxu0 %v666
      %842 = vmatmul.bf16.gmra.mxu0 %v323
      %v843 = vpop.f32.mrf.mxu0
      %v844 = vadd.f32 %v830, %v843
      %v845 = vpop.f32.mrf.mxu0
      %v846 = vadd.f32 %v832, %v845
      %847 = vdwg.mxu0
      %848 = vmatpush.bf16.msra.mxu0 0
      %849 = vmatpush.bf16.msra.mxu0 0
      %850 = vmatpush.bf16.msra.mxu0 0
      %851 = vmatpush.bf16.msra.mxu0 %v798
      %852 = vmatpush.bf16.msra.mxu0 %v699
      %853 = vmatpush.bf16.msra.mxu0 %v696
      %854 = vmatpush.bf16.msra.mxu0 %v693
      %855 = vmatpush.bf16.msra.mxu0 %v690
      %856 = vmatmul.bf16.gmra.mxu0 %v791
      %v857 = vpop.f32.mrf.mxu0
      %v858 = vadd.f32 %v844, %v857
      %v859 = vpop.f32.mrf.mxu0
      %v860 = vadd.f32 %v846, %v859
      %861 = vdwg.mxu0
      %862 = vmatpush.bf16.msra.mxu0 %v640
      %863 = vmatpush.bf16.msra.mxu0 %v637
      %864 = vmatpush.bf16.msra.mxu0 %v634
      %865 = vmatpush.bf16.msra.mxu0 %v631
      %866 = vmatpush.bf16.msra.mxu0 %v628
      %867 = vmatpush.bf16.msra.mxu0 %v625
      %868 = vmatpush.bf16.msra.mxu0 %v622
      %869 = vmatpush.bf16.msra.mxu0 %v619
      %870 = vmatmul.bf16.gmra.mxu0 %v321
      %v871 = vpop.f32.mrf.mxu0
      %v872 = vadd.f32 0.0, %v871
      %v873 = vpop.f32.mrf.mxu0
      %v874 = vadd.f32 0.0, %v873
      %875 = vdwg.mxu0
      %876 = vmatpush.bf16.msra.mxu0 %v664
      %877 = vmatpush.bf16.msra.mxu0 %v661
      %878 = vmatpush.bf16.msra.mxu0 %v658
      %879 = vmatpush.bf16.msra.mxu0 %v655
      %880 = vmatpush.bf16.msra.mxu0 %v652
      %881 = vmatpush.bf16.msra.mxu0 %v649
      %882 = vmatpush.bf16.msra.mxu0 %v646
      %883 = vmatpush.bf16.msra.mxu0 %v643
      %884 = vmatmul.bf16.gmra.mxu0 %v322
      %v885 = vpop.f32.mrf.mxu0
      %v886 = vadd.f32 %v872, %v885
      %v887 = vpop.f32.mrf.mxu0
      %v888 = vadd.f32 %v874, %v887
      %889 = vdwg.mxu0
      %890 = vmatpush.bf16.msra.mxu0 %v688
      %891 = vmatpush.bf16.msra.mxu0 %v685
      %892 = vmatpush.bf16.msra.mxu0 %v682
      %893 = vmatpush.bf16.msra.mxu0 %v679
      %894 = vmatpush.bf16.msra.mxu0 %v676
      %895 = vmatpush.bf16.msra.mxu0 %v673
      %896 = vmatpush.bf16.msra.mxu0 %v670
      %897 = vmatpush.bf16.msra.mxu0 %v667
      %898 = vmatmul.bf16.gmra.mxu0 %v323
      %v899 = vpop.f32.mrf.mxu0
      %v900 = vadd.f32 %v886, %v899
      %v901 = vpop.f32.mrf.mxu0
      %v902 = vadd.f32 %v888, %v901
      %903 = vdwg.mxu0
      %904 = vmatpush.bf16.msra.mxu0 0
      %905 = vmatpush.bf16.msra.mxu0 0
      %906 = vmatpush.bf16.msra.mxu0 0
      %907 = vmatpush.bf16.msra.mxu0 %v801
      %908 = vmatpush.bf16.msra.mxu0 %v700
      %909 = vmatpush.bf16.msra.mxu0 %v697
      %910 = vmatpush.bf16.msra.mxu0 %v694
      %911 = vmatpush.bf16.msra.mxu0 %v691
      %912 = vmatmul.bf16.gmra.mxu0 %v791
      %v913 = vpop.f32.mrf.mxu0
      %v914 = vadd.f32 %v900, %v913
      %v915 = vpop.f32.mrf.mxu0
      %v916 = vadd.f32 %v902, %v915
      %917 = vdwg.mxu0
      %918 = vmatpush.bf16.msra.mxu0 %v641
      %919 = vmatpush.bf16.msra.mxu0 %v638
      %920 = vmatpush.bf16.msra.mxu0 %v635
      %921 = vmatpush.bf16.msra.mxu0 %v632
      %922 = vmatpush.bf16.msra.mxu0 %v629
      %923 = vmatpush.bf16.msra.mxu0 %v626
      %924 = vmatpush.bf16.msra.mxu0 %v623
      %925 = vmatpush.bf16.msra.mxu0 %v620
      %926 = vmatmul.bf16.gmra.mxu0 %v321
      %v927 = vpop.f32.mrf.mxu0
      %v928 = vadd.f32 0.0, %v927
      %v929 = vpop.f32.mrf.mxu0
      %v930 = vadd.f32 0.0, %v929
      %931 = vdwg.mxu0
      %932 = vmatpush.bf16.msra.mxu0 %v665
      %933 = vmatpush.bf16.msra.mxu0 %v662
      %934 = vmatpush.bf16.msra.mxu0 %v659
      %935 = vmatpush.bf16.msra.mxu0 %v656
      %936 = vmatpush.bf16.msra.mxu0 %v653
      %937 = vmatpush.bf16.msra.mxu0 %v650
      %938 = vmatpush.bf16.msra.mxu0 %v647
      %939 = vmatpush.bf16.msra.mxu0 %v644
      %940 = vmatmul.bf16.gmra.mxu0 %v322
      %v941 = vpop.f32.mrf.mxu0
      %v942 = vadd.f32 %v928, %v941
      %v943 = vpop.f32.mrf.mxu0
      %v944 = vadd.f32 %v930, %v943
      %945 = vdwg.mxu0
      %946 = vmatpush.bf16.msra.mxu0 %v689
      %947 = vmatpush.bf16.msra.mxu0 %v686
      %948 = vmatpush.bf16.msra.mxu0 %v683
      %949 = vmatpush.bf16.msra.mxu0 %v680
      %950 = vmatpush.bf16.msra.mxu0 %v677
      %951 = vmatpush.bf16.msra.mxu0 %v674
      %952 = vmatpush.bf16.msra.mxu0 %v671
      %953 = vmatpush.bf16.msra.mxu0 %v668
      %954 = vmatmul.bf16.gmra.mxu0 %v323
      %v955 = vpop.f32.mrf.mxu0
      %v956 = vadd.f32 %v942, %v955
      %v957 = vpop.f32.mrf.mxu0
      %v958 = vadd.f32 %v944, %v957
      %959 = vdwg.mxu0
      %960 = vmatpush.bf16.msra.mxu0 0
      %961 = vmatpush.bf16.msra.mxu0 0
      %962 = vmatpush.bf16.msra.mxu0 0
      %963 = vmatpush.bf16.msra.mxu0 %v804
      %964 = vmatpush.bf16.msra.mxu0 %v701
      %965 = vmatpush.bf16.msra.mxu0 %v698
      %966 = vmatpush.bf16.msra.mxu0 %v695
      %967 = vmatpush.bf16.msra.mxu0 %v692
      %968 = vmatmul.bf16.gmra.mxu0 %v791
      %v969 = vpop.f32.mrf.mxu0
      %v970 = vadd.f32 %v956, %v969
      %v971 = vpop.f32.mrf.mxu0
      %v972 = vadd.f32 %v958, %v971
      %973 = vdwg.mxu0
      %v974 = vpack.c.bf16 %v914, %v858
      %v975 = vpack.c.bf16 %v970, %v970
      %v976 = vpack.c.bf16 %v916, %v860
      %v977 = vpack.c.bf16 %v972, %v972
      %978 = vst [vmem:[%s186] sm:$0xff] %v974
      %vm979 = vcmask 519168
      %980 = vst.msk [vmem:[%s186 + $0x8] sm:$0xf] %vm979, %v975
      %981 = vst [vmem:[%s186 + $0xc] sm:$0xff] %v976
      %982 = vst.msk [vmem:[%s186 + $0x14] sm:$0xf] %vm979, %v977
      %s983 = smul.u32 2, %s18
      %p984 = scmp.lt.s32.totalorder %s17, 1
      %s985 = scalar_select %p984, %s17, 1
      %p986 = scmp.lt.s32.totalorder %s983, 1
      %s987 = scalar_select %p986, %s983, 1
      %s988 = smul.addr %s987, 3
      %s989 = smul.addr %s985, 6
      %s990 = sadd.s32 %s988, %s989
      %s991 = smul.addr %s990, 4
      %s992 = scalar_lea.vmem %s2, %s991
      // Predicated region
      $region29: #{_resample_batch.1} parent=27 // pred_check
        %p993 = pneg %p94
      $region30: #{_resample_batch.1} parent=27 // pred_check_branch
        %995 = sbr.rel (%p993) target = $region32
      $region31: #{_resample_batch.1} parent=27 // pred_region
        %s996 = smul.u32 2, %s18
      $region32: #{_resample_batch.1} parent=27 // pred_fallthru
        _
    $region28: #{_resample_batch.1} parent=5 // pred_fallthru
      _
    %p997 = scmp.le.s32.totalorder 2, %s8
    // Predicated region
    $region33: #{_resample_batch.1} parent=5 // pred_check
      %p998 = pneg %p997
    $region34: #{_resample_batch.1} parent=5 // pred_check_branch
      %1000 = sbr.rel (%p998) target = $region36
    $region35: #{_resample_batch.1} parent=5 // pred_region
      %s1001 = ssub.s32 %s8, 2
      // Predicated region
      $region37: #{_resample_batch.1} parent=35 // pred_check
        %p1002 = pneg %p100
      $region38: #{_resample_batch.1} parent=35 // pred_check_branch
        %1004 = sbr.rel (%p1002) target = $region40
      $region39: #{_resample_batch.1} parent=35 // pred_region
        %s1005 = smul.u32 2, %s20
        %p1006 = scmp.lt.s32.totalorder %s19, 1
        %s1007 = scalar_select %p1006, %s19, 1
        %p1008 = scmp.lt.s32.totalorder %s1005, 1
        %s1009 = scalar_select %p1008, %s1005, 1
        %s1010 = smul.addr %s1009, 3
        %s1011 = smul.addr %s1007, 6
        %s1012 = sadd.s32 %s1010, %s1011
        %s1013 = smul.addr %s1012, 4
        %s1014 = scalar_lea.vmem %s2, %s1013
      $region40: #{_resample_batch.1} parent=35 // pred_fallthru
        _
    $region36: #{_resample_batch.1} parent=5 // pred_fallthru
      _
  $region6: #{_resample_batch.1} parent=0 // loop_footer
    %s12 = sadd.s32 1, %s8
  $region7: #{_resample_batch.1} parent=0 // loop_footer_branch
    %7 = sbr.rel target = $region3
  $region8: #{_resample_batch.1} parent=0 // loop_exit
    _

</llo_original>
